<compile_context>
chip_gen: v7x
topology: tpu7x:2x2x1
jax: 0.10.0
libtpu: 0.0.40
codegen_flags: <defaults>
</compile_context>

<pallas_src>
import functools
import math

import jax
import jax.numpy as jnp
from jax.experimental import pallas as pl
from jax.experimental.pallas import tpu as pltpu

_LANE = 128
_NORM_EPS = 1e-12            # F.normalize default eps
_MAX_TILE_LANES = 256 * _LANE  # bound the unrolled per-step chunk loop


def _vmem_capacity_bytes():
    try:
        return int(pltpu.get_tpu_info().vmem_capacity_bytes)
    except Exception:
        return 64 * 1024 * 1024  # v7x-safe fallback


def _metric_learning_kernel(x_ref, w_ref, b_ref, o_ref, acc_ref, *,
                            n_spatial, tail, inv_hw):
    # x_ref:   (Bt, C, hw_tile)   streaming spatial tile of Bt batch rows
    # w_ref:   (C, E)             1x1-conv weight (in, out) — resident
    # b_ref:   (1, E)             conv bias — resident
    # o_ref:   (Bt, E)            L2-normalized embeddings for this batch block
    # acc_ref: (Bt, C, 128) f32   lane-resident running spatial sum (scratch)
    s = pl.program_id(1)
    hw_tile = x_ref.shape[-1]

    @pl.when(s == 0)
    def _init():
        acc_ref[...] = jnp.zeros_like(acc_ref)

    def add_tile(limit):
        # Accumulate lanes [0, limit) of this tile with pure element-wise
        # (VALU) adds; only the single partially-valid 128-lane chunk needs a
        # compare+select. The cross-lane (XLU) reduce is deferred to finalize.
        acc = acc_ref[...]
        full, rem = divmod(limit, _LANE)
        for c in range(full):
            acc = acc + x_ref[:, :, c * _LANE:(c + 1) * _LANE].astype(jnp.float32)
        if rem:
            chunk = x_ref[:, :, full * _LANE:(full + 1) * _LANE].astype(jnp.float32)
            lane = jax.lax.broadcasted_iota(jnp.int32, chunk.shape, 2)
            acc = acc + jnp.where(lane < rem, chunk, 0.0)
        acc_ref[...] = acc

    if tail == hw_tile:
        # Spatial size divides the tile: one uniform code path, no masking.
        add_tile(hw_tile)
    else:
        if n_spatial > 1:
            @pl.when(s < n_spatial - 1)
            def _body():
                add_tile(hw_tile)

        @pl.when(s == n_spatial - 1)
        def _ragged_tail():
            add_tile(tail)

    @pl.when(s == n_spatial - 1)
    def _finalize():
        # AdaptiveAvgPool2d(1) + Flatten: single lane reduce + scaled mean.
        pooled = jnp.sum(acc_ref[...], axis=-1) * inv_hw               # (Bt, C)
        # 1x1 conv == dense layer on channels (one small MXU matmul at M=Bt).
        emb = jnp.dot(pooled, w_ref[...],
                      preferred_element_type=jnp.float32) + b_ref[...]  # (Bt, E)
        # F.normalize: x / max(||x||, eps) == x * rsqrt(max(||x||^2, eps^2))
        sq = jnp.sum(emb * emb, axis=-1, keepdims=True)                 # (Bt, 1)
        inv_norm = jax.lax.rsqrt(jnp.maximum(sq, _NORM_EPS * _NORM_EPS))
        o_ref[...] = (emb * inv_norm).astype(o_ref.dtype)


def metric_learning_forward(x_nchw, conv_w, conv_b, *, hw_tile=None,
                            batch_tile=None):
    """Pallas implementation of MetricLearning.forward.

    Args:
      x_nchw: (B, C, H, W) float32/bfloat16 feature map (== inputs[self.level]).
      conv_w: (C, E) — PyTorch Conv2d weight (E, C, 1, 1) reshaped/transposed.
      conv_b: (E,)   — Conv2d bias.
      hw_tile: optional spatial tile length (multiple of 128); auto if None.
      batch_tile: optional batch block size; auto (8 f32 / 16 bf16) if None.

    Returns:
      (B, E) float32 L2-normalized embeddings.
    """
    B, C, H, W = x_nchw.shape
    C_w, E = conv_w.shape
    assert C_w == C, (C_w, C)
    hw = H * W
    itemsize = jnp.dtype(x_nchw.dtype).itemsize

    # Free reshape of contiguous NCHW: channels stay put, spatial becomes the
    # lane-dense streaming axis. No HBM transpose / repack pass.
    x = x_nchw.reshape(B, C, hw)

    # Tiny-spatial case only: pad last dim up to one lane group (cheap, and
    # zeros are exact for the pooled sum; the mean divides by the true H*W).
    hw_p = hw
    if hw_p < _LANE:
        x = jnp.pad(x, ((0, 0), (0, 0), (0, _LANE - hw_p)))
        hw_p = _LANE
    # Larger non-multiple-of-128 spatial sizes are handled in-kernel by masking
    # the final partial 128-lane chunk (no full-tensor jnp.pad in HBM).

    # Batch blocking: amortize the ~0.35us per-grid-step cost over Bt rows and
    # make the accumulator / output blocks sublane-dense.
    if batch_tile is None:
        batch_tile = 16 if itemsize <= 2 else 8
    bt = max(1, min(B, int(batch_tile)))
    # TODO(synk): on v7x (2 TensorCores) with B <= bt the parallel batch axis
    # collapses to one grid point; capping bt at B//2 there needs a reliable
    # core-count query.

    # Generation-aware streaming-tile budget: ~capacity/8 per x buffer (double
    # buffered -> capacity/4 of VMEM for the streamed input), capped at 16 MiB.
    vmem_cap = _vmem_capacity_bytes()
    x_buf_budget = min(16 << 20, vmem_cap // 8)

    row_bytes = bt * C * itemsize
    max_lanes = max(_LANE, x_buf_budget // max(1, row_bytes))
    auto_tile = min((max_lanes // _LANE) * _LANE, _MAX_TILE_LANES)
    full_lanes = max(_LANE, (hw_p // _LANE) * _LANE)   # keep block dim <= array dim
    if hw_tile is None:
        hw_tile = min(auto_tile, full_lanes)
    hw_tile = max(_LANE, (int(hw_tile) // _LANE) * _LANE)
    hw_tile = min(hw_tile, full_lanes)

    n_spatial = pl.cdiv(hw_p, hw_tile)
    tail = hw_p - (n_spatial - 1) * hw_tile            # valid lanes in last tile
    n_batch = pl.cdiv(B, bt)

    w = conv_w.astype(jnp.float32)
    b2d = conv_b.reshape(1, E).astype(jnp.float32)

    kernel = functools.partial(
        _metric_learning_kernel,
        n_spatial=int(n_spatial), tail=int(tail), inv_hw=1.0 / float(hw))

    # VMEM demand: 2x streamed x tile (double buffered) + resident weight/bias
    # (+ their second pipeline buffer) + output block + accumulator scratch.
    x_tile_bytes = bt * C * hw_tile * itemsize
    w_bytes = C * E * 4
    b_bytes = E * 4
    out_bytes = bt * E * 4
    acc_bytes = bt * max(C, 8) * _LANE * 4
    needed = 2 * x_tile_bytes + 2 * (w_bytes + b_bytes + out_bytes) + acc_bytes
    vmem_limit = max(needed + (8 << 20), 32 << 20)
    vmem_limit = min(vmem_limit, (vmem_cap * 3) // 4)
    vmem_limit = max(vmem_limit, needed + (2 << 20))

    cost = pl.CostEstimate(
        flops=int(B * hw * C + 2 * B * C * E + 3 * B * E),
        transcendentals=int(B),
        bytes_accessed=int(x.size * itemsize + w_bytes + b_bytes + B * E * 4),
    )

    return pl.pallas_call(
        kernel,
        out_shape=jax.ShapeDtypeStruct((B, E), jnp.float32),
        grid_spec=pltpu.PrefetchScalarGridSpec(
            num_scalar_prefetch=0,
            grid=(n_batch, n_spatial),
            in_specs=[
                # Streaming feature-map tile: Bt batch rows, full channels,
                # hw_tile spatial positions (double-buffered by Pallas).
                pl.BlockSpec((bt, C, hw_tile), lambda b, s: (b, 0, s)),
                # Weight / bias stay resident (constant block index).
                pl.BlockSpec((C, E), lambda b, s: (0, 0)),
                pl.BlockSpec((1, E), lambda b, s: (0, 0)),
            ],
            out_specs=pl.BlockSpec((bt, E), lambda b, s: (b, 0)),
            scratch_shapes=[pltpu.VMEM((bt, C, _LANE), jnp.float32)],
        ),
        compiler_params=pltpu.CompilerParams(
            # Batch blocks are independent -> parallel; spatial is a reduction.
            dimension_semantics=("parallel", "arbitrary"),
            vmem_limit_bytes=int(vmem_limit),
        ),
        cost_estimate=cost,
    )(x, w, b2d)


def init_params(key, in_ch, embedding_dim, num_identities, num_subcenters=1):
    """Deterministic parameter init mirroring MetricLearning.__init__ shapes."""
    k_w, k_b, k_arc = jax.random.split(key, 3)

    # Conv2d(in_ch, embedding_dim, 1): weight (E, in_ch, 1, 1), torch default bound.
    bound = 1.0 / math.sqrt(in_ch)
    conv_w_oihw = jax.random.uniform(
        k_w, (embedding_dim, in_ch, 1, 1), jnp.float32, -bound, bound)
    conv_b = jax.random.uniform(k_b, (embedding_dim,), jnp.float32, -bound, bound)
    # Kernel-friendly (in, out) layout for the 1x1 conv weight.
    conv_w = jnp.transpose(conv_w_oihw[:, :, 0, 0], (1, 0))  # (C, E)

    # ArcFace weight (num_subcenters, E, num_identities) — xavier uniform.
    # TODO(synk): only used in training_step (ArcFace loss), not in forward().
    limit = math.sqrt(6.0 / (embedding_dim + num_identities))
    arc_w = jax.random.uniform(
        k_arc, (num_subcenters, embedding_dim, num_identities),
        jnp.float32, -limit, limit)
    return conv_w, conv_b, arc_w


def _reference(x_nchw, conv_w, conv_b):
    x32 = x_nchw.astype(jnp.float32)
    feat = jnp.einsum("bchw,ce->behw", x32, conv_w) + conv_b[None, :, None, None]
    emb = jnp.mean(feat, axis=(2, 3))
    return emb / jnp.maximum(jnp.linalg.norm(emb, axis=-1, keepdims=True), _NORM_EPS)


if __name__ == "__main__":
    key = jax.random.PRNGKey(0)
    B, C, H, W = 2, 8, 16, 16
    embedding_dim = 256
    num_identities = 10
    level = 5

    k_x, k_p, k_x2, k_x3, k_x4 = jax.random.split(key, 5)
    # inputs is a list of feature maps; only inputs[level] matters for forward().
    x_level = jax.random.normal(k_x, (B, C, H, W), jnp.float32)
    inputs = [None] * level + [x_level]

    conv_w, conv_b, _arc_w = init_params(k_p, C, embedding_dim, num_identities)

    # 1) auto tile (single spatial step at this size)
    out = jax.block_until_ready(metric_learning_forward(inputs[level], conv_w, conv_b))
    ref = _reference(x_level, conv_w, conv_b)
    assert out.shape == (B, embedding_dim)
    assert jnp.allclose(out, ref, atol=1e-5, rtol=1e-5)
    assert jnp.allclose(jnp.linalg.norm(out, axis=-1), 1.0, atol=1e-5)

    # 2) forced hw_tile=128 -> exercises multi-step streaming accumulation
    out2 = jax.block_until_ready(
        metric_learning_forward(x_level, conv_w, conv_b, hw_tile=128))
    assert jnp.allclose(out2, ref, atol=1e-5, rtol=1e-5)

    # 3) spatial size >= 128 but not a multiple of 128 -> in-kernel tail masking
    x_rag = jax.random.normal(k_x3, (B, C, 13, 13), jnp.float32)   # hw = 169
    out3 = jax.block_until_ready(metric_learning_forward(x_rag, conv_w, conv_b))
    ref3 = _reference(x_rag, conv_w, conv_b)
    assert jnp.allclose(out3, ref3, atol=1e-5, rtol=1e-5)

    # 4) tiny spatial size (< 128) -> lane-group pad path
    x_odd = jax.random.normal(k_x2, (B, C, 10, 10), jnp.float32)   # hw = 100
    out4 = jax.block_until_ready(metric_learning_forward(x_odd, conv_w, conv_b))
    ref4 = _reference(x_odd, conv_w, conv_b)
    assert jnp.allclose(out4, ref4, atol=1e-5, rtol=1e-5)

    # 5) bf16 input streamed at native width, f32 accumulation
    out5 = jax.block_until_ready(
        metric_learning_forward(x_level.astype(jnp.bfloat16), conv_w, conv_b))
    ref5 = _reference(x_level.astype(jnp.bfloat16), conv_w, conv_b)
    assert jnp.allclose(out5, ref5, atol=1e-3, rtol=1e-3)

    # 6) batch > batch tile (Bt=8) with a ragged last batch block
    x_big = jax.random.normal(k_x4, (9, C, H, W), jnp.float32)
    out6 = jax.block_until_ready(metric_learning_forward(x_big, conv_w, conv_b))
    ref6 = _reference(x_big, conv_w, conv_b)
    assert out6.shape == (9, embedding_dim)
    assert jnp.allclose(out6, ref6, atol=1e-5, rtol=1e-5)

    print("KERNEL_OK")
</pallas_src>

<mosaic_0001>
module attributes {stable_mosaic.version = 11 : i64} {
  func.func @_metric_learning_kernel(%arg0: i32, %arg1: i32, %arg2: memref<2x8x256xf32, #tpu.memory_space<vmem>>, %arg3: memref<8x256xf32, #tpu.memory_space<vmem>>, %arg4: memref<1x256xf32, #tpu.memory_space<vmem>>, %arg5: memref<2x256xf32, #tpu.memory_space<vmem>>, %arg6: memref<2x8x128xf32, #tpu.memory_space<vmem>>) attributes {dimension_semantics = [#tpu.dimension_semantics<parallel>, #tpu.dimension_semantics<arbitrary>], iteration_bounds = array<i64: 1, 1>, scalar_prefetch = 0 : i64, scratch_operands = 1 : i64, tpu.core_type = #tpu.core_type<tc>, window_params = [{transform_indices = @transform_0, window_bounds = array<i64: 2, 8, 256>}, {pipeline_mode = #tpu.pipeline_mode<synchronous>, transform_indices = @transform_1, window_bounds = array<i64: 8, 256>}, {pipeline_mode = #tpu.pipeline_mode<synchronous>, transform_indices = @transform_2, window_bounds = array<i64: 1, 256>}, {transform_indices = @transform_3, window_bounds = array<i64: 2, 256>}]} {
    %c0_i32 = arith.constant 0 : i32
    %0 = arith.cmpi eq, %arg1, %c0_i32 : i32
    %1 = arith.extui %0 : i1 to i32
    %c0_i32_0 = arith.constant 0 : i32
    %2 = arith.cmpi ne, %1, %c0_i32_0 : i32
    scf.if %2 {
      %cst = arith.constant 0.000000e+00 : f32
      %12 = vector.broadcast %cst : f32 to vector<2x8x128xf32>
      %c0_13 = arith.constant 0 : index
      %c0_14 = arith.constant 0 : index
      %c0_15 = arith.constant 0 : index
      %13 = vector.load %arg6[%c0_13, %c0_14, %c0_15] : memref<2x8x128xf32, #tpu.memory_space<vmem>>, vector<2x8x128xf32>
      tpu.vector_store %arg6[%c0_13, %c0_14, %c0_15], %12 {strides = array<i32>} : memref<2x8x128xf32, #tpu.memory_space<vmem>>, vector<2x8x128xf32>,
    } else {
    }
    %c0 = arith.constant 0 : index
    %c0_1 = arith.constant 0 : index
    %c0_2 = arith.constant 0 : index
    %3 = vector.load %arg6[%c0, %c0_1, %c0_2] : memref<2x8x128xf32, #tpu.memory_space<vmem>>, vector<2x8x128xf32>
    %c0_3 = arith.constant 0 : index
    %c0_4 = arith.constant 0 : index
    %c0_5 = arith.constant 0 : index
    %4 = vector.load %arg2[%c0_3, %c0_4, %c0_5] : memref<2x8x256xf32, #tpu.memory_space<vmem>>, vector<2x8x128xf32>
    %5 = arith.addf %3, %4 : vector<2x8x128xf32>
    %c0_6 = arith.constant 0 : index
    %c0_7 = arith.constant 0 : index
    %c128 = arith.constant 128 : index
    %6 = vector.load %arg2[%c0_6, %c0_7, %c128] : memref<2x8x256xf32, #tpu.memory_space<vmem>>, vector<2x8x128xf32>
    %7 = arith.addf %5, %6 : vector<2x8x128xf32>
    %c0_8 = arith.constant 0 : index
    %c0_9 = arith.constant 0 : index
    %c0_10 = arith.constant 0 : index
    %8 = vector.load %arg6[%c0_8, %c0_9, %c0_10] : memref<2x8x128xf32, #tpu.memory_space<vmem>>, vector<2x8x128xf32>
    tpu.vector_store %arg6[%c0_8, %c0_9, %c0_10], %7 {strides = array<i32>} : memref<2x8x128xf32, #tpu.memory_space<vmem>>, vector<2x8x128xf32>,
    %c0_i32_11 = arith.constant 0 : i32
    %9 = arith.cmpi eq, %arg1, %c0_i32_11 : i32
    %10 = arith.extui %9 : i1 to i32
    %c0_i32_12 = arith.constant 0 : i32
    %11 = arith.cmpi ne, %10, %c0_i32_12 : i32
    scf.if %11 {
      %c0_13 = arith.constant 0 : index
      %c0_14 = arith.constant 0 : index
      %c0_15 = arith.constant 0 : index
      %12 = vector.load %arg6[%c0_13, %c0_14, %c0_15] : memref<2x8x128xf32, #tpu.memory_space<vmem>>, vector<2x8x128xf32>
      %cst = arith.constant dense<0.000000e+00> : vector<2x8xf32>
      %13 = vector.multi_reduction <add>, %12, %cst [2] : vector<2x8x128xf32> to vector<2x8xf32>
      %cst_16 = arith.constant 3.906250e-03 : f32
      %14 = vector.broadcast %cst_16 : f32 to vector<2x8xf32>
      %15 = arith.mulf %13, %14 : vector<2x8xf32>
      %c0_17 = arith.constant 0 : index
      %c0_18 = arith.constant 0 : index
      %16 = vector.load %arg3[%c0_17, %c0_18] : memref<8x256xf32, #tpu.memory_space<vmem>>, vector<8x256xf32>
      %cst_19 = arith.constant dense<0.000000e+00> : vector<2x256xf32>
      %17 = tpu.matmul %15, %16, %cst_19 {dimension_numbers = #tpu.dot_dimension_numbers<[1], [0], [0], [1], [0, 0, 1, 1], [], []>} : vector<2x8xf32>, vector<8x256xf32>, vector<2x256xf32> -> vector<2x256xf32>
      %c0_20 = arith.constant 0 : index
      %c0_21 = arith.constant 0 : index
      %18 = vector.load %arg4[%c0_20, %c0_21] : memref<1x256xf32, #tpu.memory_space<vmem>>, vector<1x256xf32>
      %19 = vector.broadcast %18 : vector<1x256xf32> to vector<2x256xf32>
      %20 = arith.addf %17, %19 : vector<2x256xf32>
      %21 = arith.mulf %20, %20 : vector<2x256xf32>
      %cst_22 = arith.constant dense<0.000000e+00> : vector<2xf32>
      %22 = vector.multi_reduction <add>, %21, %cst_22 [1] : vector<2x256xf32> to vector<2xf32>
      %23 = vector.shape_cast %22 : vector<2xf32> to vector<2x1xf32>
      %cst_23 = arith.constant 1.000000e-24 : f32
      %24 = vector.broadcast %cst_23 : f32 to vector<2x1xf32>
      %25 = arith.maximumf %23, %24 : vector<2x1xf32>
      %26 = math.rsqrt %25 : vector<2x1xf32>
      %27 = vector.broadcast %26 : vector<2x1xf32> to vector<2x256xf32>
      %28 = arith.mulf %20, %27 : vector<2x256xf32>
      %c0_24 = arith.constant 0 : index
      %c0_25 = arith.constant 0 : index
      %29 = vector.load %arg5[%c0_24, %c0_25] : memref<2x256xf32, #tpu.memory_space<vmem>>, vector<2x256xf32>
      tpu.vector_store %arg5[%c0_24, %c0_25], %28 {strides = array<i32>} : memref<2x256xf32, #tpu.memory_space<vmem>>, vector<2x256xf32>,
    } else {
    }
    return
  }
  func.func @transform_0(%arg0: i32, %arg1: i32) -> (i32, i32, i32) {
    %c0_i32 = arith.constant 0 : i32
    %c0_i32_0 = arith.constant 0 : i32
    return %arg0, %c0_i32, %arg1 : i32, i32, i32
  }
  func.func @transform_1(%arg0: i32, %arg1: i32) -> (i32, i32) {
    %c0_i32 = arith.constant 0 : i32
    %c0_i32_0 = arith.constant 0 : i32
    %c0_i32_1 = arith.constant 0 : i32
    return %c0_i32, %c0_i32_0 : i32, i32
  }
  func.func @transform_2(%arg0: i32, %arg1: i32) -> (i32, i32) {
    %c0_i32 = arith.constant 0 : i32
    %c0_i32_0 = arith.constant 0 : i32
    %c0_i32_1 = arith.constant 0 : i32
    return %c0_i32, %c0_i32_0 : i32, i32
  }
  func.func @transform_3(%arg0: i32, %arg1: i32) -> (i32, i32) {
    %c0_i32 = arith.constant 0 : i32
    %c0_i32_0 = arith.constant 0 : i32
    return %arg0, %c0_i32 : i32, i32
  }
}

</mosaic_0001>

<llo_original>
// kernel: tpu_custom_call.1
$region0: #{tpu_custom_call.1}
  #allocation0 [shape = 'u32[]', space=smem, size = 0x4, offset = 0x4, fixed_abs, tag = 'smem constant byte address 0x4 - core index']
  #allocation1 [shape = 'u32[144,128]{1,0:T(1,128)}', space=vmem, size = 0x12000, scoped, tag = 'internal scratch']
  #allocation2 [shape = 'f32[2,8,128]{2,1,0:T(8,128)}', space=vmem, size = 0x2000, scoped, tag = 'scratch operand']
  %s0 = inlined_call_operand.hbm [shape: f32[2,8,256], index: 0, kind: input, shape index: {}]
  %s1 = inlined_call_operand.hbm [shape: f32[8,256], index: 1, kind: input, shape index: {}]
  %s2 = inlined_call_operand.vmem [shape: f32[1,256], index: 2, kind: input, shape index: {}]
  %s3 = inlined_call_operand.hbm [shape: f32[2,256], index: 3, kind: output, shape index: {}]
  %s4 = sld [smem:[#allocation0]]
  $region38: #{tpu_custom_call.1} parent=0
    _
  %s6 = ssub.s32 1, %s4
  %s7 = scalar_select 0, %s6, %s4
  $region1: #{tpu_custom_call.1} parent=0
    #allocation3 [shape = 'u8[16384]{0}', space=vmem, size = 0x4000, scoped, tag = 'input window, operand 0, single buffered']
    #allocation4 [shape = 's32[1]{0}', space=sflag, size = 0x4, scoped, tag = 'scoped memory for tpu_custom_call.1']
    #allocation5 [shape = 's32[1]{0}', space=sflag, size = 0x4, scoped, tag = 'scoped memory for tpu_custom_call.1']
    #allocation6 [shape = 'u8[8192]{0}', space=vmem, size = 0x2000, scoped, tag = 'input window, operand 1, single buffered']
    #allocation7 [shape = 's32[1]{0}', space=sflag, size = 0x4, scoped, tag = 'scoped memory for tpu_custom_call.1']
    #allocation8 [shape = 'u8[2048]{0}', space=vmem, size = 0x800, scoped, tag = 'output window, operand 0, single buffered']
    %8 = vsyncpa [#allocation4], 0
    %9 = vsyncpa [#allocation7], 0
    %10 = vsyncpa [#allocation5], 0
    // Predicated region
    $region2: #{tpu_custom_call.1} parent=1 // pred_check
      _
    $region3: #{tpu_custom_call.1} parent=1 // pred_check_branch
      %12 = sbr.rel (0) target = $region5
    $region4: #{tpu_custom_call.1} parent=1 // pred_region
      %s14 = ssub.s32 512, 512
      %15 = vsyncadd [#allocation4], %s14
      %s16 = sshll.u32 [#allocation3], 4
      %s17 = int_to_ptr.vmem [resolvable:$true] %s16
      %22 = dma.hbm_to_vmem [thread:$0]  %s0, 512, %s17, [#allocation4], 256, 256, 16
    $region5: #{tpu_custom_call.1} parent=1 // pred_fallthru
      _
    // Predicated region
    $region6: #{tpu_custom_call.1} parent=1 // pred_check
      _
    $region7: #{tpu_custom_call.1} parent=1 // pred_check_branch
      %24 = sbr.rel (0) target = $region9
    $region8: #{tpu_custom_call.1} parent=1 // pred_region
      %s26 = ssub.s32 256, 256
      %27 = vsyncadd [#allocation7], %s26
      %s29 = sshll.u32 [#allocation6], 4
      %s30 = int_to_ptr.vmem [resolvable:$true] %s29
      %32 = dma.hbm_to_vmem [thread:$0]  %s1, 256, %s30, [#allocation7]
    $region9: #{tpu_custom_call.1} parent=1 // pred_fallthru
      _
    // Predicated region
    $region10: #{tpu_custom_call.1} parent=1 // pred_check
      _
    $region11: #{tpu_custom_call.1} parent=1 // pred_check_branch
      %34 = sbr.rel (0) target = $region13
    $region12: #{tpu_custom_call.1} parent=1 // pred_region
      _
    $region13: #{tpu_custom_call.1} parent=1 // pred_fallthru
      _
    // Predicated region
    $region14: #{tpu_custom_call.1} parent=1 // pred_check
      _
    $region15: #{tpu_custom_call.1} parent=1 // pred_check_branch
      %36 = sbr.rel (0) target = $region17
    $region16: #{tpu_custom_call.1} parent=1 // pred_region
      %37 = dma.done [#allocation4], 512
    $region17: #{tpu_custom_call.1} parent=1 // pred_fallthru
      _
    // Predicated region
    $region18: #{tpu_custom_call.1} parent=1 // pred_check
      _
    $region19: #{tpu_custom_call.1} parent=1 // pred_check_branch
      %39 = sbr.rel (0) target = $region21
    $region20: #{tpu_custom_call.1} parent=1 // pred_region
      %40 = dma.done [#allocation7], 256
    $region21: #{tpu_custom_call.1} parent=1 // pred_fallthru
      _
    %p41 = scmp.eq.s32.totalorder 0, 0
    // Predicated region
    $region22: #{tpu_custom_call.1} parent=1 // pred_check
      %p42 = pneg %p41
    $region23: #{tpu_custom_call.1} parent=1 // pred_check_branch
      %44 = sbr.rel (%p42) target = $region25
    $region24: #{tpu_custom_call.1} parent=1 // pred_region
      %45 = vst [vmem:[#allocation2] sm:$0xff] 0.0
      %46 = vst [vmem:[#allocation2 + $0x8] sm:$0xff] 0.0
    $region25: #{tpu_custom_call.1} parent=1 // pred_fallthru
      _
    %v47 = vld [vmem:[#allocation2] sm:$0xff]
    %v48 = vld [vmem:[#allocation2 + $0x8] sm:$0xff]
    %v49 = vld [vmem:[#allocation3] sm:$0xff]
    %v50 = vld [vmem:[#allocation3 + $0x10] sm:$0xff]
    %v51 = vadd.f32 %v47, %v49
    %v52 = vadd.f32 %v48, %v50
    %v53 = vld [vmem:[#allocation3 + $0x8] sm:$0xff]
    %v54 = vld [vmem:[#allocation3 + $0x18] sm:$0xff]
    %v55 = vadd.f32 %v51, %v53
    %v56 = vadd.f32 %v52, %v54
    %57 = vst [vmem:[#allocation2] sm:$0xff] %v55
    %58 = vst [vmem:[#allocation2 + $0x8] sm:$0xff] %v56
    // Predicated region
    $region26: #{tpu_custom_call.1} parent=1 // pred_check
      %p59 = pneg %p41
    $region27: #{tpu_custom_call.1} parent=1 // pred_check_branch
      %61 = sbr.rel (%p59) target = $region29
    $region28: #{tpu_custom_call.1} parent=1 // pred_region
      %v62 = vld [vmem:[#allocation2] sm:$0xff]
      %v63 = vld [vmem:[#allocation2 + $0x8] sm:$0xff]
      %64 = vadd.xlane.f32.xlu0 %v62
      %v65 = vpop.xlane.xlu0 %64
      %66 = vadd.xlane.f32.xlu0 %v63
      %v67 = vpop.xlane.xlu0 %66
      %v68 = vmul.f32 %v65, 0.00390625
      %v69 = vmul.f32 %v67, 0.00390625
      %v70 = vld [vmem:[#allocation6] sm:$0xff]
      %v71 = vld [vmem:[#allocation6 + $0x8] sm:$0xff]
      %v72 = vld [vmem:[%s2] sm:$0x3]
      %v74 = vlaneseq
      %v75 = vshrl.u32 %v74, 7
      %v76 = vsub.s32 0, %v75
      %v77 = vrot.slane %v72, %v76
      %v78 = vlaneseq
      %v79 = vshrl.u32 %v78, 7
      %v80 = vsub.s32 1, %v79
      %v81 = vrot.slane %v72, %v80
      %v86 = vlaneseq
      %v87 = vand.u32 %v86, 127
      %v88 = vlaneseq
      %v89 = vshrl.u32 %v88, 7
      %v90 = vsub.s32 %v87, %v89
      %v91 = vrot.slane %v68, %v90
      %v92 = vlaneseq
      %v93 = vshrl.u32 %v92, 7
      %v94 = vsub.s32 %v87, %v93
      %v95 = vrot.slane %v69, %v94
      %vm96 = vcmask 1041409
      %v97 = vsel %vm96, %v95, %v91
      %vm98 = vcmask 64512
      %v99 = vsel %vm98, %v97, 0
      %101 = vmatprep.subr.mxu0 %v71
      %102 = vmatpush1.msra.mxu0 %v70
      %103 = vmatprep.subr.mxu0 0.0
      %104 = vmatpush1.msra.mxu0 0.0
      %105 = vmatprep.subr.mxu0 0.0
      %106 = vmatpush1.msra.mxu0 0.0
      %107 = vmatprep.subr.mxu0 0.0
      %108 = vmatpush1.msra.mxu0 0.0
      %109 = vmatprep.subr.mxu0 0.0
      %110 = vmatpush1.msra.mxu0 0.0
      %111 = vmatprep.subr.mxu0 0.0
      %112 = vmatpush1.msra.mxu0 0.0
      %113 = vmatprep.subr.mxu0 0.0
      %114 = vmatpush1.msra.mxu0 0.0
      %115 = vmatprep.subr.mxu0 0.0
      %116 = vmatpush1.msra.mxu0 0.0
      %117 = vmatprep.subr.mxu0 0.0
      %118 = vmatpush1.msra.mxu0 0.0
      %119 = vmatprep.subr.mxu0 0.0
      %120 = vmatpush1.msra.mxu0 0.0
      %121 = vmatprep.subr.mxu0 0.0
      %122 = vmatpush1.msra.mxu0 0.0
      %123 = vmatprep.subr.mxu0 0.0
      %124 = vmatpush1.msra.mxu0 0.0
      %125 = vmatprep.subr.mxu0 0.0
      %126 = vmatpush1.msra.mxu0 0.0
      %127 = vmatprep.subr.mxu0 0.0
      %128 = vmatpush1.msra.mxu0 0.0
      %129 = vmatprep.subr.mxu0 0.0
      %130 = vmatpush1.msra.mxu0 0.0
      %131 = vmatprep.subr.mxu0 0.0
      %132 = vmatpush1.msra.mxu0 0.0
      %133 = vmatprep.subr.mxu0 0.0
      %134 = vmatpush1.msra.mxu0 0.0
      %135 = vmatprep.subr.mxu0 0.0
      %136 = vmatpush1.msra.mxu0 0.0
      %137 = vmatprep.subr.mxu0 0.0
      %138 = vmatpush1.msra.mxu0 0.0
      %139 = vmatprep.subr.mxu0 0.0
      %140 = vmatpush1.msra.mxu0 0.0
      %141 = vmatprep.subr.mxu0 0.0
      %142 = vmatpush1.msra.mxu0 0.0
      %143 = vmatprep.subr.mxu0 0.0
      %144 = vmatpush1.msra.mxu0 0.0
      %145 = vmatprep.subr.mxu0 0.0
      %146 = vmatpush1.msra.mxu0 0.0
      %147 = vmatprep.subr.mxu0 0.0
      %148 = vmatpush1.msra.mxu0 0.0
      %149 = vmatprep.subr.mxu0 0.0
      %150 = vmatpush1.msra.mxu0 0.0
      %151 = vmatprep.subr.mxu0 0.0
      %152 = vmatpush1.msra.mxu0 0.0
      %153 = vmatprep.subr.mxu0 0.0
      %154 = vmatpush1.msra.mxu0 0.0
      %155 = vmatprep.subr.mxu0 0.0
      %156 = vmatpush1.msra.mxu0 0.0
      %157 = vmatprep.subr.mxu0 0.0
      %158 = vmatpush1.msra.mxu0 0.0
      %159 = vmatprep.subr.mxu0 0.0
      %160 = vmatpush1.msra.mxu0 0.0
      %161 = vmatprep.subr.mxu0 0.0
      %162 = vmatpush1.msra.mxu0 0.0
      %163 = vmatprep.subr.mxu0 0.0
      %164 = vmatpush1.msra.mxu0 0.0
      %165 = vmatprep.mubr.f32.mxu0 0.0
      %166 = vmatmul.mubr.f32.gmra.mrb[0].mxu0 %v99
      %v167 = vpop.f32.mrb[0].mxu0
      %v168 = vadd.f32 %v77, %v167
      %v169 = vpop.f32.mrb[0].mxu0
      %v170 = vadd.f32 %v81, %v169
      %171 = vdwg.mxu0
      %v172 = vmul.f32 %v168, %v168
      %v173 = vmul.f32 %v170, %v170
      %vm174 = vcmask 1041408
      %v175 = vsel %vm174, %v172, 0.0
      %v176 = vsel %vm174, %v173, 0.0
      %v177 = vadd.f32 %v175, %v176
      %178 = vadd.xlane.f32.xlu0 %v177
      %v179 = vpop.xlane.xlu0 %178
      %v180 = vmax.f32 %v179, 1e-24
      %v181 = vrsqrt.pop %v180
      %v182 = vmul.f32 %v168, %v181
      %v183 = vmul.f32 %v170, %v181
      %v186 = vcombine.low %v182, %v183
      %v188 = vunpack.c.l.s4 1983009808
      %v189 = vunpack.c.0.s8 %v188
      %v190 = vlaneseq
      %v191 = vshrl.u32 %v190, 7
      %v192 = vsub.s32 %v189, %v191
      %v193 = vrot.slane %v186, %v192
      %195 = vst [vmem:[#allocation8] sm:$0xf] %v193
    $region29: #{tpu_custom_call.1} parent=1 // pred_fallthru
      _
    // Predicated region
    $region30: #{tpu_custom_call.1} parent=1 // pred_check
      _
    $region31: #{tpu_custom_call.1} parent=1 // pred_check_branch
      %197 = sbr.rel (0) target = $region33
    $region32: #{tpu_custom_call.1} parent=1 // pred_region
      %s199 = ssub.s32 64, 64
      %200 = vsyncadd [#allocation5], %s199
      %s202 = sshll.u32 [#allocation8], 4
      %s203 = int_to_ptr.vmem [resolvable:$true] %s202
      %205 = dma.vmem_to_hbm [thread:$0]  %s203, 64, %s3, [#allocation5]
    $region33: #{tpu_custom_call.1} parent=1 // pred_fallthru
      _
    // Predicated region
    $region34: #{tpu_custom_call.1} parent=1 // pred_check
      _
    $region35: #{tpu_custom_call.1} parent=1 // pred_check_branch
      %207 = sbr.rel (0) target = $region37
    $region36: #{tpu_custom_call.1} parent=1 // pred_region
      %208 = dma.done [#allocation5], 64
    $region37: #{tpu_custom_call.1} parent=1 // pred_fallthru
      _
    %209 = vsyncpa [#allocation4], 1
    %210 = vsyncpa [#allocation7], 1
    %211 = vsyncpa [#allocation5], 1

</llo_original>
